<compile_context>
chip_gen: v7x
topology: tpu7x:2x2x1
jax: 0.10.0
libtpu: 0.0.40
codegen_flags: <defaults>
</compile_context>

<pallas_src>
import math

import jax
import jax.numpy as jnp
from jax.experimental import pallas as pl
from jax.experimental.pallas import tpu as pltpu


# ----------------------------------------------------------------------------
# Pallas kernel 1: cosine scores fused with row-wise max / argmax
#   node_max[b, n] = max_m  cos(a[b, n], b[b, m])
#   node_idx[b, n] = argmax_m (first maximum, matching torch.max semantics)
# ----------------------------------------------------------------------------
def _cos_match_kernel(a_ref, b_ref, max_ref, idx_ref):
    a = a_ref[...].astype(jnp.float32)                     # (B, Na, C)
    b = b_ref[...].astype(jnp.float32)                     # (B, Nb, C)
    # rsqrt lowers to the EUP slot; eps only guards an all-zero metric row
    # (the reference produces NaN there), negligible otherwise.
    a = a * jax.lax.rsqrt(jnp.sum(a * a, axis=-1, keepdims=True) + 1e-12)
    b = b * jax.lax.rsqrt(jnp.sum(b * b, axis=-1, keepdims=True) + 1e-12)
    s = jnp.einsum("bnc,bmc->bnm", a, b,
                   preferred_element_type=jnp.float32)     # (B, Na, Nb), stays in VMEM
    nb = s.shape[-1]
    m = jnp.max(s, axis=-1)                                # (B, Na)
    col = jax.lax.broadcasted_iota(jnp.int32, s.shape, 2)
    idx = jnp.min(jnp.where(s == m[..., None], col, nb), axis=-1)  # first argmax
    max_ref[...] = m
    idx_ref[...] = idx.astype(jnp.int32)


def cosine_match(a, b):
    """a: (B, Na, C) src metric, b: (B, Nb, C) dst metric -> (node_max, node_idx)."""
    B, Na, _ = a.shape
    node_max, node_idx = pl.pallas_call(
        _cos_match_kernel,
        out_shape=(jax.ShapeDtypeStruct((B, Na), jnp.float32),
                   jax.ShapeDtypeStruct((B, Na), jnp.int32)),
    )(a, b)
    return node_max, node_idx


# ----------------------------------------------------------------------------
# Pallas kernel 2: AWGN channel (power estimate + scale std-normal + add)
# ----------------------------------------------------------------------------
def _awgn_kernel(x_ref, z_ref, snr_ref, noised_ref, noise_ref):
    x = x_ref[...]
    # NOTE: power pooled over the WHOLE transmitted block (batch included),
    # matching torch AWGN's mean over input_signal.reshape(-1).
    power = jnp.mean(x * x)
    amp = jnp.sqrt(power / snr_ref[0, 0])        # eval path of AWGN (is_train=False)
    # TODO(synk): is_train=True noise-power jitter (0.5..2.5x) not implemented.
    noise = amp * z_ref[...]
    noise_ref[...] = noise
    noised_ref[...] = x + noise


def awgn_add(transmit, snr_db, key):
    B, L = transmit.shape
    total = B * L
    # SNR as a runtime scalar input -> no Mosaic recompile per SNR value.
    snr_arr = jnp.full((1, 1), 10.0 ** (float(snr_db) / 10.0), jnp.float32)
    z = jax.random.normal(key, (total,), jnp.float32)
    # Lane/sublane-dense slab: (total//128, 128) when possible (e.g. (8,128)).
    shape2d = (total // 128, 128) if total % 128 == 0 else (B, L)
    x2 = transmit.astype(jnp.float32).reshape(shape2d)
    z2 = z.reshape(shape2d)
    noised, noise = pl.pallas_call(
        _awgn_kernel,
        out_shape=(jax.ShapeDtypeStruct(shape2d, jnp.float32),
                   jax.ShapeDtypeStruct(shape2d, jnp.float32)),
    )(x2, z2, snr_arr)
    return noised.reshape(B, L), noise.reshape(B, L)


# ----------------------------------------------------------------------------
# Pallas kernel 3: 1x1 conv (post_quant_conv) in channels-first / lane-dense form
#   out (Cout, T) = W (Cout, Cin) "@" x (Cin, T) + b   with Cin = Cout = 4
#   -> plain VPU multiply-adds, output last dim = tokens (unmasked vst).
# ----------------------------------------------------------------------------
def _conv1x1_kernel(x_ref, w_ref, b_ref, o_ref):
    x = x_ref[...]                               # (Cin, T)
    w = w_ref[...]                               # (Cout, Cin)
    b = b_ref[...]                               # (Cout, 1)
    cout, cin = w.shape
    t = x.shape[1]
    acc = jnp.broadcast_to(b, (cout, t))
    for ci in range(cin):                        # Cin=4 -> 4 VPU FMAs per out chan
        acc = acc + w[:, ci:ci + 1] * x[ci:ci + 1, :]
    o_ref[...] = acc


def conv1x1_cf(x_cf, weight, bias, tile_t=256):
    """x_cf: (Cin, T) channels-first token slab -> (Cout, T)."""
    Cin, T = x_cf.shape
    Cout = weight.shape[0]
    w2 = weight[:, :, 0, 0].astype(jnp.float32)          # (Cout, Cin)
    b2 = bias.reshape(Cout, 1).astype(jnp.float32)
    if T < tile_t or T % tile_t != 0:
        tile_t = T                                       # single full block, no padding
    grid = (T // tile_t,)
    return pl.pallas_call(
        _conv1x1_kernel,
        out_shape=jax.ShapeDtypeStruct((Cout, T), jnp.float32),
        grid=grid,
        in_specs=[pl.BlockSpec((Cin, tile_t), lambda t: (0, t)),
                  pl.BlockSpec((Cout, Cin), lambda t: (0, 0)),
                  pl.BlockSpec((Cout, 1), lambda t: (0, 0))],
        out_specs=pl.BlockSpec((Cout, tile_t), lambda t: (0, t)),
        compiler_params=pltpu.CompilerParams(dimension_semantics=("parallel",)),
    )(x_cf.astype(jnp.float32), w2, b2)


# ----------------------------------------------------------------------------
# ToMe bipartite soft matching (random 2D), reimplementing fm.* semantics.
# Index bookkeeping / gathers / scatters are JAX glue; the fused cosine+max
# kernel is the Pallas hot path.
# ----------------------------------------------------------------------------
def bipartite_soft_matching_random2d(metric, w, h, sx, sy, r, key):
    B, N, C = metric.shape
    if r <= 0:
        return (lambda x: x), (lambda x: x)

    hsy, wsx = h // sy, w // sx
    num_dst = hsy * wsx
    rand_sel = jax.random.randint(key, (hsy, wsx), 0, sy * sx)       # dst slot per window
    ibv = -jax.nn.one_hot(rand_sel, sy * sx, dtype=jnp.int32)        # -1 at dst position
    ibv = ibv.reshape(hsy, wsx, sy, sx).transpose(0, 2, 1, 3).reshape(hsy * sy, wsx * sx)
    if (hsy * sy) < h or (wsx * sx) < w:
        idx_buffer = jnp.zeros((h, w), jnp.int32).at[:hsy * sy, :wsx * sx].set(ibv)
    else:
        idx_buffer = ibv
    assert idx_buffer.size == N, "token count must equal h*w"

    order = jnp.argsort(idx_buffer.reshape(-1))       # dst (-1) entries first (stable)
    a_idx = order[num_dst:]                           # src token indices
    b_idx = order[:num_dst]                           # dst token indices

    def split(x):
        return x[:, a_idx, :], x[:, b_idx, :]

    a_m, b_m = split(metric)
    node_max, node_idx = cosine_match(a_m, b_m)       # Pallas (fused scores+max/argmax)

    rr = min(a_m.shape[1], r)
    edge_order = jnp.argsort(-node_max, axis=-1)      # descending similarity
    unm_idx = edge_order[:, rr:]                      # kept src tokens
    src_idx = edge_order[:, :rr]                      # merged src tokens
    dst_idx = jnp.take_along_axis(node_idx, src_idx, axis=-1)

    def merge(x):
        src, dst = split(x)

        def one(src_b, dst_b, unm_i, src_i, dst_i):
            unm = src_b[unm_i]                                        # (Nsrc-rr, C)
            sm = src_b[src_i]                                         # (rr, C)
            add = jnp.zeros_like(dst_b).at[dst_i].add(sm)
            cnt = jnp.zeros((dst_b.shape[0],), dst_b.dtype).at[dst_i].add(1.0)
            # scatter_reduce(..., 'mean', include_self=True) semantics
            dst_new = (dst_b + add) / (1.0 + cnt)[:, None]
            return jnp.concatenate([unm, dst_new], axis=0)

        return jax.vmap(one)(src, dst, unm_idx, src_idx, dst_idx)

    def unmerge(x):
        unm_len = unm_idx.shape[1]

        def one(x_b, unm_i, src_i, dst_i):
            unm = x_b[:unm_len]
            dstv = x_b[unm_len:]
            srcv = dstv[dst_i]
            out = jnp.zeros((N, x_b.shape[-1]), x_b.dtype)
            out = out.at[b_idx].set(dstv)
            out = out.at[a_idx[unm_i]].set(unm)
            out = out.at[a_idx[src_i]].set(srcv)
            return out

        return jax.vmap(one)(x, unm_idx, src_idx, dst_idx)

    return merge, unmerge


# ----------------------------------------------------------------------------
# JSCCMergingNet (default config: use_conv_encoder=False, dynamic_dm=False)
# ----------------------------------------------------------------------------
class JSCCMergingNet:
    def __init__(self, ori_feature_size=(16, 16), merging_ratio=0.5, key=None):
        key = jax.random.PRNGKey(42) if key is None else key
        self.ori_size = ori_feature_size
        self.sx, self.sy = 2, 2
        self.n_channels = 4
        self.merging_ratio = merging_ratio
        self.signal_length = ori_feature_size[0] * ori_feature_size[1] * self.n_channels
        self.pruned_dim = int(ori_feature_size[0] * ori_feature_size[1] / 4 * merging_ratio)
        self.seed_length = self.signal_length - self.n_channels * 4 * self.pruned_dim

        k_pw, k_pb, k_ew, k_eb, self.merge_key = jax.random.split(key, 5)
        # post_quant_conv: Conv2d(4, 4, kernel_size=1) — deterministic init
        bound = 1.0 / math.sqrt(4.0)
        self.pq_w = jax.random.uniform(k_pw, (4, 4, 1, 1), jnp.float32, -bound, bound)
        self.pq_b = jax.random.uniform(k_pb, (4,), jnp.float32, -bound, bound)
        # nn.Linear(seed_length, seed_length): created for __init__ parity; never
        # used in the default (non-conv-encoder) forward path.
        lb = 1.0 / math.sqrt(self.seed_length)
        self.enc_w = jax.random.uniform(k_ew, (self.seed_length, self.seed_length),
                                        jnp.float32, -lb, lb)
        self.enc_b = jax.random.uniform(k_eb, (self.seed_length,), jnp.float32, -lb, lb)
        # TODO(synk): diffusers VAE `Decoder` (UpDecoderBlock2D x4, 128..512 ch) is an
        # external module with no definition provided; it is not ported here.

    def feature_merger(self, latent_code, num_pruning_neuron):
        oh, ow = self.ori_size
        original_tokens = oh * ow
        downsample = int(math.ceil(math.sqrt(original_tokens // latent_code.shape[1])))
        w = int(math.ceil(ow / downsample))
        h = int(math.ceil(oh / downsample))
        return bipartite_soft_matching_random2d(
            latent_code, w, h, self.sx, self.sy, num_pruning_neuron, self.merge_key)

    def forward(self, latents, SNR_dB=0.0, seed=0, merging_ratio=0.5):
        # `latents` is NCHW (B, 4, H, W), same as the PyTorch module.
        B, C, H, W = latents.shape
        n_dim = H * W / 4
        merging_ratio = self.merging_ratio              # non-dynamic_dm path
        num_pruning_neuron = int(merging_ratio * n_dim)

        latent_code = jnp.transpose(latents, (0, 2, 3, 1)).reshape(B, H * W, C)
        latent_code = latent_code.reshape(B, (H * W) // 4, C * 4).astype(jnp.float32)

        merge, unmerge = self.feature_merger(latent_code, num_pruning_neuron)
        merged_latents = merge(latent_code)
        transmit_signal = merged_latents.reshape(B, -1)

        noise_key = jax.random.PRNGKey(seed)
        noised, channel_noise = awgn_add(transmit_signal, SNR_dB, noise_key)   # Pallas
        noised = noised.reshape(merged_latents.shape)

        unmerged = unmerge(noised)                                  # (B, HW/4, 4C)
        # post_quant_conv directly on the token slab (no NCHW round trip):
        # channels-first (Cin, B*H*W) -> lane-dense output (Cout, B*H*W).
        x_cf = unmerged.reshape(B * H * W, C).T                     # (C, B*H*W)
        y_cf = conv1x1_cf(x_cf, self.pq_w, self.pq_b)               # Pallas (Cout, B*H*W)
        y = jnp.transpose(y_cf.reshape(C, B, H, W), (1, 0, 2, 3))   # NCHW
        # TODO(synk): y = self.decoder(x) skipped (external diffusers Decoder).
        return y, channel_noise


if __name__ == "__main__":
    key = jax.random.PRNGKey(0)
    k_lat, k_net = jax.random.split(key)

    B, C, H, W = 2, 4, 16, 16
    latents = jax.random.normal(k_lat, (B, C, H, W), jnp.float32)

    net = JSCCMergingNet(ori_feature_size=(H, W), merging_ratio=0.5, key=k_net)
    y, noise = net.forward(latents, SNR_dB=0.0, seed=0)
    jax.block_until_ready(y)
    jax.block_until_ready(noise)

    n_tokens = (H * W) // 4
    r = int(net.merging_ratio * (H * W) / 4)
    assert y.shape == (B, C, H, W)
    assert noise.shape == (B, (n_tokens - r) * C * 4)
    assert bool(jnp.all(jnp.isfinite(y))) and bool(jnp.all(jnp.isfinite(noise)))
    print("KERNEL_OK")
</pallas_src>

<mosaic_0001>
module attributes {stable_mosaic.version = 11 : i64} {
  func.func @_cos_match_kernel(%arg0: memref<2x48x16xf32, #tpu.memory_space<vmem>>, %arg1: memref<2x16x16xf32, #tpu.memory_space<vmem>>, %arg2: memref<2x48xf32, #tpu.memory_space<vmem>>, %arg3: memref<2x48xi32, #tpu.memory_space<vmem>>) attributes {dimension_semantics = [], scalar_prefetch = 0 : i64, scratch_operands = 0 : i64, tpu.core_type = #tpu.core_type<tc>} {
    %c0 = arith.constant 0 : index
    %c0_0 = arith.constant 0 : index
    %c0_1 = arith.constant 0 : index
    %0 = vector.load %arg0[%c0, %c0_0, %c0_1] : memref<2x48x16xf32, #tpu.memory_space<vmem>>, vector<2x48x16xf32>
    %c0_2 = arith.constant 0 : index
    %c0_3 = arith.constant 0 : index
    %c0_4 = arith.constant 0 : index
    %1 = vector.load %arg1[%c0_2, %c0_3, %c0_4] : memref<2x16x16xf32, #tpu.memory_space<vmem>>, vector<2x16x16xf32>
    %2 = arith.mulf %0, %0 : vector<2x48x16xf32>
    %cst = arith.constant dense<0.000000e+00> : vector<2x48xf32>
    %3 = vector.multi_reduction <add>, %2, %cst [2] : vector<2x48x16xf32> to vector<2x48xf32>
    %4 = vector.shape_cast %3 : vector<2x48xf32> to vector<2x48x1xf32>
    %cst_5 = arith.constant 9.99999996E-13 : f32
    %5 = vector.broadcast %cst_5 : f32 to vector<2x48x1xf32>
    %6 = arith.addf %4, %5 : vector<2x48x1xf32>
    %7 = math.rsqrt %6 : vector<2x48x1xf32>
    %8 = vector.broadcast %7 : vector<2x48x1xf32> to vector<2x48x16xf32>
    %9 = arith.mulf %0, %8 : vector<2x48x16xf32>
    %10 = arith.mulf %1, %1 : vector<2x16x16xf32>
    %cst_6 = arith.constant dense<0.000000e+00> : vector<2x16xf32>
    %11 = vector.multi_reduction <add>, %10, %cst_6 [2] : vector<2x16x16xf32> to vector<2x16xf32>
    %12 = vector.shape_cast %11 : vector<2x16xf32> to vector<2x16x1xf32>
    %cst_7 = arith.constant 9.99999996E-13 : f32
    %13 = vector.broadcast %cst_7 : f32 to vector<2x16x1xf32>
    %14 = arith.addf %12, %13 : vector<2x16x1xf32>
    %15 = math.rsqrt %14 : vector<2x16x1xf32>
    %16 = vector.broadcast %15 : vector<2x16x1xf32> to vector<2x16x16xf32>
    %17 = arith.mulf %1, %16 : vector<2x16x16xf32>
    "tpu.trace_start"() <{level = 10 : i32, message = "bnc,bmc->bnm"}> : () -> ()
    %cst_8 = arith.constant dense<0.000000e+00> : vector<2x48x16xf32>
    %18 = tpu.matmul %9, %17, %cst_8 {dimension_numbers = #tpu.dot_dimension_numbers<[2], [2], [1], [1], [0, 0, 0, 1, 1, 1], [0], [0]>} : vector<2x48x16xf32>, vector<2x16x16xf32>, vector<2x48x16xf32> -> vector<2x48x16xf32>
    "tpu.trace_stop"() : () -> ()
    %cst_9 = arith.constant dense<0xFF800000> : vector<2x48xf32>
    %19 = vector.multi_reduction <maximumf>, %18, %cst_9 [2] : vector<2x48x16xf32> to vector<2x48xf32>
    %20 = tpu.iota {dimensions = array<i32: 2>} : vector<2x48x16xi32>
    %21 = vector.shape_cast %19 : vector<2x48xf32> to vector<2x48x1xf32>
    %22 = vector.broadcast %21 : vector<2x48x1xf32> to vector<2x48x16xf32>
    %23 = arith.cmpf oeq, %18, %22 : vector<2x48x16xf32>
    %c16_i32 = arith.constant 16 : i32
    %24 = vector.broadcast %c16_i32 : i32 to vector<2x48x16xi32>
    %25 = arith.select %23, %20, %24 : vector<2x48x16xi1>, vector<2x48x16xi32>
    %cst_10 = arith.constant dense<2147483647> : vector<2x48xi32>
    %26 = vector.multi_reduction <minsi>, %25, %cst_10 [2] : vector<2x48x16xi32> to vector<2x48xi32>
    %c0_11 = arith.constant 0 : index
    %c0_12 = arith.constant 0 : index
    %27 = vector.load %arg2[%c0_11, %c0_12] : memref<2x48xf32, #tpu.memory_space<vmem>>, vector<2x48xf32>
    tpu.vector_store %arg2[%c0_11, %c0_12], %19 {strides = array<i32>} : memref<2x48xf32, #tpu.memory_space<vmem>>, vector<2x48xf32>,
    %c0_13 = arith.constant 0 : index
    %c0_14 = arith.constant 0 : index
    %28 = vector.load %arg3[%c0_13, %c0_14] : memref<2x48xi32, #tpu.memory_space<vmem>>, vector<2x48xi32>
    tpu.vector_store %arg3[%c0_13, %c0_14], %26 {strides = array<i32>} : memref<2x48xi32, #tpu.memory_space<vmem>>, vector<2x48xi32>,
    return
  }
}

</mosaic_0001>

<llo_original>
// kernel: tpu_custom_call.1
$region0: #{tpu_custom_call.1}
  #allocation0 [shape = 'u32[]', space=smem, size = 0x4, offset = 0x4, fixed_abs, tag = 'smem constant byte address 0x4 - core index']
  #allocation1 [shape = 'u32[144,128]{1,0:T(1,128)}', space=vmem, size = 0x12000, scoped, tag = 'internal scratch']
  %s0 = inlined_call_operand.vmem [shape: f32[2,48,16], index: 0, kind: input, shape index: {}]
  %s1 = inlined_call_operand.vmem [shape: f32[2,16,16], index: 1, kind: input, shape index: {}]
  %s2 = inlined_call_operand.hbm [shape: f32[2,48], index: 2, kind: output, shape index: {0}]
  %s3 = inlined_call_operand.hbm [shape: s32[2,48], index: 3, kind: output, shape index: {1}]
  %4 = xla_tuple %s2, %s3
  %s5 = sld [smem:[#allocation0]]
  $region26: #{tpu_custom_call.1} parent=0
    _
  %s7 = ssub.s32 1, %s5
  %s8 = scalar_select 0, %s7, %s5
  $region1: #{tpu_custom_call.1} parent=0
    #allocation2 [shape = 'u8[1024]{0}', space=vmem, size = 0x400, scoped, tag = 'output window, operand 0, single buffered']
    #allocation3 [shape = 's32[1]{0}', space=sflag, size = 0x4, scoped, tag = 'scoped memory for tpu_custom_call.1']
    #allocation4 [shape = 'u8[1024]{0}', space=vmem, size = 0x400, scoped, tag = 'output window, operand 1, single buffered']
    #allocation5 [shape = 's32[1]{0}', space=sflag, size = 0x4, scoped, tag = 'scoped memory for tpu_custom_call.1']
    %9 = vsyncpa [#allocation3], 0
    %10 = vsyncpa [#allocation5], 0
    // Predicated region
    $region2: #{tpu_custom_call.1} parent=1 // pred_check
      _
    $region3: #{tpu_custom_call.1} parent=1 // pred_check_branch
      %12 = sbr.rel (0) target = $region5
    $region4: #{tpu_custom_call.1} parent=1 // pred_region
      _
    $region5: #{tpu_custom_call.1} parent=1 // pred_fallthru
      _
    // Predicated region
    $region6: #{tpu_custom_call.1} parent=1 // pred_check
      _
    $region7: #{tpu_custom_call.1} parent=1 // pred_check_branch
      %14 = sbr.rel (0) target = $region9
    $region8: #{tpu_custom_call.1} parent=1 // pred_region
      _
    $region9: #{tpu_custom_call.1} parent=1 // pred_fallthru
      _
    %v15 = vld [vmem:[%s0] sm:$0xff]
    %v16 = vld [vmem:[%s0 + $0x8] sm:$0xff]
    %v17 = vld [vmem:[%s0 + $0x10] sm:$0xff]
    %v18 = vld [vmem:[%s0 + $0x18] sm:$0xff]
    %v19 = vld [vmem:[%s0 + $0x20] sm:$0xff]
    %v20 = vld [vmem:[%s0 + $0x28] sm:$0xff]
    %v21 = vld [vmem:[%s0 + $0x30] sm:$0xff]
    %v22 = vld [vmem:[%s0 + $0x38] sm:$0xff]
    %v23 = vld [vmem:[%s0 + $0x40] sm:$0xff]
    %v24 = vld [vmem:[%s0 + $0x48] sm:$0xff]
    %v25 = vld [vmem:[%s0 + $0x50] sm:$0xff]
    %v26 = vld [vmem:[%s0 + $0x58] sm:$0xff]
    %v27 = vld [vmem:[%s1] sm:$0xff]
    %v28 = vld [vmem:[%s1 + $0x8] sm:$0xff]
    %v29 = vld [vmem:[%s1 + $0x10] sm:$0xff]
    %v30 = vld [vmem:[%s1 + $0x18] sm:$0xff]
    %v31 = vmul.f32 %v15, %v15
    %v32 = vmul.f32 %v16, %v16
    %v33 = vmul.f32 %v17, %v17
    %v34 = vmul.f32 %v18, %v18
    %v35 = vmul.f32 %v19, %v19
    %v36 = vmul.f32 %v20, %v20
    %v37 = vmul.f32 %v21, %v21
    %v38 = vmul.f32 %v22, %v22
    %v39 = vmul.f32 %v23, %v23
    %v40 = vmul.f32 %v24, %v24
    %v41 = vmul.f32 %v25, %v25
    %v42 = vmul.f32 %v26, %v26
    %vm43 = vcmask 130048
    %v44 = vsel %vm43, %v31, 0.0
    %45 = vadd.xlane.f32.xlu0 %v44
    %v46 = vpop.xlane.xlu0 %45
    %v47 = vsel %vm43, %v32, 0.0
    %48 = vadd.xlane.f32.xlu0 %v47
    %v49 = vpop.xlane.xlu0 %48
    %v50 = vsel %vm43, %v33, 0.0
    %51 = vadd.xlane.f32.xlu0 %v50
    %v52 = vpop.xlane.xlu0 %51
    %v53 = vsel %vm43, %v34, 0.0
    %54 = vadd.xlane.f32.xlu0 %v53
    %v55 = vpop.xlane.xlu0 %54
    %v56 = vsel %vm43, %v35, 0.0
    %57 = vadd.xlane.f32.xlu0 %v56
    %v58 = vpop.xlane.xlu0 %57
    %v59 = vsel %vm43, %v36, 0.0
    %60 = vadd.xlane.f32.xlu0 %v59
    %v61 = vpop.xlane.xlu0 %60
    %v62 = vsel %vm43, %v37, 0.0
    %63 = vadd.xlane.f32.xlu0 %v62
    %v64 = vpop.xlane.xlu0 %63
    %v65 = vsel %vm43, %v38, 0.0
    %66 = vadd.xlane.f32.xlu0 %v65
    %v67 = vpop.xlane.xlu0 %66
    %v68 = vsel %vm43, %v39, 0.0
    %69 = vadd.xlane.f32.xlu0 %v68
    %v70 = vpop.xlane.xlu0 %69
    %v71 = vsel %vm43, %v40, 0.0
    %72 = vadd.xlane.f32.xlu0 %v71
    %v73 = vpop.xlane.xlu0 %72
    %v74 = vsel %vm43, %v41, 0.0
    %75 = vadd.xlane.f32.xlu0 %v74
    %v76 = vpop.xlane.xlu0 %75
    %v77 = vsel %vm43, %v42, 0.0
    %78 = vadd.xlane.f32.xlu0 %v77
    %v79 = vpop.xlane.xlu0 %78
    %v80 = vadd.f32 %v46, 1e-12
    %v81 = vadd.f32 %v49, 1e-12
    %v82 = vadd.f32 %v52, 1e-12
    %v83 = vadd.f32 %v55, 1e-12
    %v84 = vadd.f32 %v58, 1e-12
    %v85 = vadd.f32 %v61, 1e-12
    %v86 = vadd.f32 %v64, 1e-12
    %v87 = vadd.f32 %v67, 1e-12
    %v88 = vadd.f32 %v70, 1e-12
    %v89 = vadd.f32 %v73, 1e-12
    %v90 = vadd.f32 %v76, 1e-12
    %v91 = vadd.f32 %v79, 1e-12
    %v92 = vrsqrt.pop %v80
    %v93 = vrsqrt.pop %v81
    %v94 = vrsqrt.pop %v82
    %v95 = vrsqrt.pop %v83
    %v96 = vrsqrt.pop %v84
    %v97 = vrsqrt.pop %v85
    %v98 = vrsqrt.pop %v86
    %v99 = vrsqrt.pop %v87
    %v100 = vrsqrt.pop %v88
    %v101 = vrsqrt.pop %v89
    %v102 = vrsqrt.pop %v90
    %v103 = vrsqrt.pop %v91
    %v104 = vmul.f32 %v15, %v92
    %v105 = vmul.f32 %v16, %v93
    %v106 = vmul.f32 %v17, %v94
    %v107 = vmul.f32 %v18, %v95
    %v108 = vmul.f32 %v19, %v96
    %v109 = vmul.f32 %v20, %v97
    %v110 = vmul.f32 %v21, %v98
    %v111 = vmul.f32 %v22, %v99
    %v112 = vmul.f32 %v23, %v100
    %v113 = vmul.f32 %v24, %v101
    %v114 = vmul.f32 %v25, %v102
    %v115 = vmul.f32 %v26, %v103
    %v116 = vmul.f32 %v27, %v27
    %v117 = vmul.f32 %v28, %v28
    %v118 = vmul.f32 %v29, %v29
    %v119 = vmul.f32 %v30, %v30
    %v120 = vsel %vm43, %v116, 0.0
    %121 = vadd.xlane.f32.xlu0 %v120
    %v122 = vpop.xlane.xlu0 %121
    %v123 = vsel %vm43, %v117, 0.0
    %124 = vadd.xlane.f32.xlu0 %v123
    %v125 = vpop.xlane.xlu0 %124
    %v126 = vsel %vm43, %v118, 0.0
    %127 = vadd.xlane.f32.xlu0 %v126
    %v128 = vpop.xlane.xlu0 %127
    %v129 = vsel %vm43, %v119, 0.0
    %130 = vadd.xlane.f32.xlu0 %v129
    %v131 = vpop.xlane.xlu0 %130
    %v132 = vadd.f32 %v122, 1e-12
    %v133 = vadd.f32 %v125, 1e-12
    %v134 = vadd.f32 %v128, 1e-12
    %v135 = vadd.f32 %v131, 1e-12
    %v136 = vrsqrt.pop %v132
    %v137 = vrsqrt.pop %v133
    %v138 = vrsqrt.pop %v134
    %v139 = vrsqrt.pop %v135
    %v140 = vmul.f32 %v27, %v136
    %v141 = vmul.f32 %v28, %v137
    %v142 = vmul.f32 %v29, %v138
    %v143 = vmul.f32 %v30, %v139
    %v145 = vsel %vm43, %v104, 0
    %v148 = vsel %vm43, %v105, 0
    %v151 = vsel %vm43, %v106, 0
    %v154 = vsel %vm43, %v107, 0
    %v157 = vsel %vm43, %v108, 0
    %v160 = vsel %vm43, %v109, 0
    %v163 = vsel %vm43, %v140, 0
    %v166 = vsel %vm43, %v141, 0
    %168 = vmatprep.subr.mxu0 0.0
    %169 = vmatpush1.xpose.msra.mxu0 %v163
    %170 = vmatprep.subr.mxu0 0.0
    %171 = vmatpush1.xpose.msra.mxu0 %v166
    %172 = vmatprep.subr.mxu0 0.0
    %173 = vmatpush1.xpose.msra.mxu0 0.0
    %174 = vmatprep.subr.mxu0 0.0
    %175 = vmatpush1.xpose.msra.mxu0 0.0
    %176 = vmatprep.subr.mxu0 0.0
    %177 = vmatpush1.xpose.msra.mxu0 0.0
    %178 = vmatprep.subr.mxu0 0.0
    %179 = vmatpush1.xpose.msra.mxu0 0.0
    %180 = vmatprep.subr.mxu0 0.0
    %181 = vmatpush1.xpose.msra.mxu0 0.0
    %182 = vmatprep.subr.mxu0 0.0
    %183 = vmatpush1.xpose.msra.mxu0 0.0
    %184 = vmatprep.subr.mxu0 0.0
    %185 = vmatpush1.xpose.msra.mxu0 0.0
    %186 = vmatprep.subr.mxu0 0.0
    %187 = vmatpush1.xpose.msra.mxu0 0.0
    %188 = vmatprep.subr.mxu0 0.0
    %189 = vmatpush1.xpose.msra.mxu0 0.0
    %190 = vmatprep.subr.mxu0 0.0
    %191 = vmatpush1.xpose.msra.mxu0 0.0
    %192 = vmatprep.subr.mxu0 0.0
    %193 = vmatpush1.xpose.msra.mxu0 0.0
    %194 = vmatprep.subr.mxu0 0.0
    %195 = vmatpush1.xpose.msra.mxu0 0.0
    %196 = vmatprep.subr.mxu0 0.0
    %197 = vmatpush1.xpose.msra.mxu0 0.0
    %198 = vmatprep.subr.mxu0 0.0
    %199 = vmatpush1.xpose.msra.mxu0 0.0
    %200 = vmatprep.subr.mxu0 0.0
    %201 = vmatpush1.xpose.msra.mxu0 0.0
    %202 = vmatprep.subr.mxu0 0.0
    %203 = vmatpush1.xpose.msra.mxu0 0.0
    %204 = vmatprep.subr.mxu0 0.0
    %205 = vmatpush1.xpose.msra.mxu0 0.0
    %206 = vmatprep.subr.mxu0 0.0
    %207 = vmatpush1.xpose.msra.mxu0 0.0
    %208 = vmatprep.subr.mxu0 0.0
    %209 = vmatpush1.xpose.msra.mxu0 0.0
    %210 = vmatprep.subr.mxu0 0.0
    %211 = vmatpush1.xpose.msra.mxu0 0.0
    %212 = vmatprep.subr.mxu0 0.0
    %213 = vmatpush1.xpose.msra.mxu0 0.0
    %214 = vmatprep.subr.mxu0 0.0
    %215 = vmatpush1.xpose.msra.mxu0 0.0
    %216 = vmatprep.subr.mxu0 0.0
    %217 = vmatpush1.xpose.msra.mxu0 0.0
    %218 = vmatprep.subr.mxu0 0.0
    %219 = vmatpush1.xpose.msra.mxu0 0.0
    %220 = vmatprep.subr.mxu0 0.0
    %221 = vmatpush1.xpose.msra.mxu0 0.0
    %222 = vmatprep.subr.mxu0 0.0
    %223 = vmatpush1.xpose.msra.mxu0 0.0
    %224 = vmatprep.subr.mxu0 0.0
    %225 = vmatpush1.xpose.msra.mxu0 0.0
    %226 = vmatprep.subr.mxu0 0.0
    %227 = vmatpush1.xpose.msra.mxu0 0.0
    %228 = vmatprep.subr.mxu0 0.0
    %229 = vmatpush1.xpose.msra.mxu0 0.0
    %230 = vmatprep.subr.mxu0 0.0
    %231 = vmatpush1.xpose.msra.mxu0 0.0
    %232 = vmatprep.mubr.f32.mxu0 0.0
    %233 = vmatmul.mubr.f32.gmra.mrb[0].mxu0 %v145
    %v234 = vpop.f32.mrb[0].mxu0
    %v235 = vadd.f32 0.0, %v234
    %v236 = vpop.f32.mrb[0].mxu0
    %237 = vmatprep.mubr.f32.mxu0 0.0
    %238 = vmatmul.mubr.f32.gmra.mrb[0].mxu0 %v148
    %v239 = vpop.f32.mrb[0].mxu0
    %v240 = vadd.f32 0.0, %v239
    %v241 = vpop.f32.mrb[0].mxu0
    %242 = vmatprep.mubr.f32.mxu0 0.0
    %243 = vmatmul.mubr.f32.gmra.mrb[0].mxu0 %v151
    %v244 = vpop.f32.mrb[0].mxu0
    %v245 = vadd.f32 0.0, %v244
    %v246 = vpop.f32.mrb[0].mxu0
    %247 = vmatprep.mubr.f32.mxu0 0.0
    %248 = vmatmul.mubr.f32.gmra.mrb[0].mxu0 %v154
    %v249 = vpop.f32.mrb[0].mxu0
    %v250 = vadd.f32 0.0, %v249
    %v251 = vpop.f32.mrb[0].mxu0
    %252 = vmatprep.mubr.f32.mxu0 0.0
    %253 = vmatmul.mubr.f32.gmra.mrb[0].mxu0 %v157
    %v254 = vpop.f32.mrb[0].mxu0
    %v255 = vadd.f32 0.0, %v254
    %v256 = vpop.f32.mrb[0].mxu0
    %257 = vmatprep.mubr.f32.mxu0 0.0
    %258 = vmatmul.mubr.f32.gmra.mrb[0].mxu0 %v160
    %v259 = vpop.f32.mrb[0].mxu0
    %v260 = vadd.f32 0.0, %v259
    %v261 = vpop.f32.mrb[0].mxu0
    %262 = vdwg.mxu0
    %v264 = vsel %vm43, %v110, 0
    %v267 = vsel %vm43, %v111, 0
    %v270 = vsel %vm43, %v112, 0
    %v273 = vsel %vm43, %v113, 0
    %v276 = vsel %vm43, %v114, 0
    %v279 = vsel %vm43, %v115, 0
    %v282 = vsel %vm43, %v142, 0
    %v285 = vsel %vm43, %v143, 0
    %287 = vmatprep.subr.mxu0 0.0
    %288 = vmatpush1.xpose.msra.mxu0 %v282
    %289 = vmatprep.subr.mxu0 0.0
    %290 = vmatpush1.xpose.msra.mxu0 %v285
    %291 = vmatprep.subr.mxu0 0.0
    %292 = vmatpush1.xpose.msra.mxu0 0.0
    %293 = vmatprep.subr.mxu0 0.0
    %294 = vmatpush1.xpose.msra.mxu0 0.0
    %295 = vmatprep.subr.mxu0 0.0
    %296 = vmatpush1.xpose.msra.mxu0 0.0
    %297 = vmatprep.subr.mxu0 0.0
    %298 = vmatpush1.xpose.msra.mxu0 0.0
    %299 = vmatprep.subr.mxu0 0.0
    %300 = vmatpush1.xpose.msra.mxu0 0.0
    %301 = vmatprep.subr.mxu0 0.0
    %302 = vmatpush1.xpose.msra.mxu0 0.0
    %303 = vmatprep.subr.mxu0 0.0
    %304 = vmatpush1.xpose.msra.mxu0 0.0
    %305 = vmatprep.subr.mxu0 0.0
    %306 = vmatpush1.xpose.msra.mxu0 0.0
    %307 = vmatprep.subr.mxu0 0.0
    %308 = vmatpush1.xpose.msra.mxu0 0.0
    %309 = vmatprep.subr.mxu0 0.0
    %310 = vmatpush1.xpose.msra.mxu0 0.0
    %311 = vmatprep.subr.mxu0 0.0
    %312 = vmatpush1.xpose.msra.mxu0 0.0
    %313 = vmatprep.subr.mxu0 0.0
    %314 = vmatpush1.xpose.msra.mxu0 0.0
    %315 = vmatprep.subr.mxu0 0.0
    %316 = vmatpush1.xpose.msra.mxu0 0.0
    %317 = vmatprep.subr.mxu0 0.0
    %318 = vmatpush1.xpose.msra.mxu0 0.0
    %319 = vmatprep.subr.mxu0 0.0
    %320 = vmatpush1.xpose.msra.mxu0 0.0
    %321 = vmatprep.subr.mxu0 0.0
    %322 = vmatpush1.xpose.msra.mxu0 0.0
    %323 = vmatprep.subr.mxu0 0.0
    %324 = vmatpush1.xpose.msra.mxu0 0.0
    %325 = vmatprep.subr.mxu0 0.0
    %326 = vmatpush1.xpose.msra.mxu0 0.0
    %327 = vmatprep.subr.mxu0 0.0
    %328 = vmatpush1.xpose.msra.mxu0 0.0
    %329 = vmatprep.subr.mxu0 0.0
    %330 = vmatpush1.xpose.msra.mxu0 0.0
    %331 = vmatprep.subr.mxu0 0.0
    %332 = vmatpush1.xpose.msra.mxu0 0.0
    %333 = vmatprep.subr.mxu0 0.0
    %334 = vmatpush1.xpose.msra.mxu0 0.0
    %335 = vmatprep.subr.mxu0 0.0
    %336 = vmatpush1.xpose.msra.mxu0 0.0
    %337 = vmatprep.subr.mxu0 0.0
    %338 = vmatpush1.xpose.msra.mxu0 0.0
    %339 = vmatprep.subr.mxu0 0.0
    %340 = vmatpush1.xpose.msra.mxu0 0.0
    %341 = vmatprep.subr.mxu0 0.0
    %342 = vmatpush1.xpose.msra.mxu0 0.0
    %343 = vmatprep.subr.mxu0 0.0
    %344 = vmatpush1.xpose.msra.mxu0 0.0
    %345 = vmatprep.subr.mxu0 0.0
    %346 = vmatpush1.xpose.msra.mxu0 0.0
    %347 = vmatprep.subr.mxu0 0.0
    %348 = vmatpush1.xpose.msra.mxu0 0.0
    %349 = vmatprep.subr.mxu0 0.0
    %350 = vmatpush1.xpose.msra.mxu0 0.0
    %351 = vmatprep.mubr.f32.mxu0 0.0
    %352 = vmatmul.mubr.f32.gmra.mrb[0].mxu0 %v264
    %v353 = vpop.f32.mrb[0].mxu0
    %v354 = vadd.f32 0.0, %v353
    %v355 = vpop.f32.mrb[0].mxu0
    %356 = vmatprep.mubr.f32.mxu0 0.0
    %357 = vmatmul.mubr.f32.gmra.mrb[0].mxu0 %v267
    %v358 = vpop.f32.mrb[0].mxu0
    %v359 = vadd.f32 0.0, %v358
    %v360 = vpop.f32.mrb[0].mxu0
    %361 = vmatprep.mubr.f32.mxu0 0.0
    %362 = vmatmul.mubr.f32.gmra.mrb[0].mxu0 %v270
    %v363 = vpop.f32.mrb[0].mxu0
    %v364 = vadd.f32 0.0, %v363
    %v365 = vpop.f32.mrb[0].mxu0
    %366 = vmatprep.mubr.f32.mxu0 0.0
    %367 = vmatmul.mubr.f32.gmra.mrb[0].mxu0 %v273
    %v368 = vpop.f32.mrb[0].mxu0
    %v369 = vadd.f32 0.0, %v368
    %v370 = vpop.f32.mrb[0].mxu0
    %371 = vmatprep.mubr.f32.mxu0 0.0
    %372 = vmatmul.mubr.f32.gmra.mrb[0].mxu0 %v276
    %v373 = vpop.f32.mrb[0].mxu0
    %v374 = vadd.f32 0.0, %v373
    %v375 = vpop.f32.mrb[0].mxu0
    %376 = vmatprep.mubr.f32.mxu0 0.0
    %377 = vmatmul.mubr.f32.gmra.mrb[0].mxu0 %v279
    %v378 = vpop.f32.mrb[0].mxu0
    %v379 = vadd.f32 0.0, %v378
    %v380 = vpop.f32.mrb[0].mxu0
    %381 = vdwg.mxu0
    %v382 = vsel %vm43, %v235, -inf
    %383 = vmax.xlane.f32.xlu0 %v382
    %v384 = vpop.xlane.xlu0 %383
    %v385 = vsel %vm43, %v240, -inf
    %386 = vmax.xlane.f32.xlu0 %v385
    %v387 = vpop.xlane.xlu0 %386
    %v388 = vsel %vm43, %v245, -inf
    %389 = vmax.xlane.f32.xlu0 %v388
    %v390 = vpop.xlane.xlu0 %389
    %v391 = vsel %vm43, %v250, -inf
    %392 = vmax.xlane.f32.xlu0 %v391
    %v393 = vpop.xlane.xlu0 %392
    %v394 = vsel %vm43, %v255, -inf
    %395 = vmax.xlane.f32.xlu0 %v394
    %v396 = vpop.xlane.xlu0 %395
    %v397 = vsel %vm43, %v260, -inf
    %398 = vmax.xlane.f32.xlu0 %v397
    %v399 = vpop.xlane.xlu0 %398
    %v400 = vsel %vm43, %v354, -inf
    %401 = vmax.xlane.f32.xlu0 %v400
    %v402 = vpop.xlane.xlu0 %401
    %v403 = vsel %vm43, %v359, -inf
    %404 = vmax.xlane.f32.xlu0 %v403
    %v405 = vpop.xlane.xlu0 %404
    %v406 = vsel %vm43, %v364, -inf
    %407 = vmax.xlane.f32.xlu0 %v406
    %v408 = vpop.xlane.xlu0 %407
    %v409 = vsel %vm43, %v369, -inf
    %410 = vmax.xlane.f32.xlu0 %v409
    %v411 = vpop.xlane.xlu0 %410
    %v412 = vsel %vm43, %v374, -inf
    %413 = vmax.xlane.f32.xlu0 %v412
    %v414 = vpop.xlane.xlu0 %413
    %v415 = vsel %vm43, %v379, -inf
    %416 = vmax.xlane.f32.xlu0 %v415
    %v417 = vpop.xlane.xlu0 %416
    %v418 = vlaneseq
    %v419 = vand.u32 %v418, 127
    %vm420 = vcmp.eq.f32.partialorder %v235, %v384
    %vm421 = vcmp.eq.f32.partialorder %v240, %v387
    %vm422 = vcmp.eq.f32.partialorder %v245, %v390
    %vm423 = vcmp.eq.f32.partialorder %v250, %v393
    %vm424 = vcmp.eq.f32.partialorder %v255, %v396
    %vm425 = vcmp.eq.f32.partialorder %v260, %v399
    %vm426 = vcmp.eq.f32.partialorder %v354, %v402
    %vm427 = vcmp.eq.f32.partialorder %v359, %v405
    %vm428 = vcmp.eq.f32.partialorder %v364, %v408
    %vm429 = vcmp.eq.f32.partialorder %v369, %v411
    %vm430 = vcmp.eq.f32.partialorder %v374, %v414
    %vm431 = vcmp.eq.f32.partialorder %v379, %v417
    %v432 = vsel %vm420, %v419, 16
    %v433 = vsel %vm421, %v419, 16
    %v434 = vsel %vm422, %v419, 16
    %v435 = vsel %vm423, %v419, 16
    %v436 = vsel %vm424, %v419, 16
    %v437 = vsel %vm425, %v419, 16
    %v438 = vsel %vm426, %v419, 16
    %v439 = vsel %vm427, %v419, 16
    %v440 = vsel %vm428, %v419, 16
    %v441 = vsel %vm429, %v419, 16
    %v442 = vsel %vm430, %v419, 16
    %v443 = vsel %vm431, %v419, 16
    %v444 = vsel %vm43, %v432, 2147483647
    %v445 = vand.u32 %v444, 65535
    %v446 = vshra.s32 %v444, 16
    %v447 = vcvt.s32.f32 %v445
    %v448 = vcvt.s32.f32 %v446
    %449 = vmin.xlane.f32.xlu0 %v448
    %v450 = vpop.xlane.xlu0 %449
    %vm451 = vcmp.eq.f32.partialorder %v448, %v450
    %v452 = vsel %vm451, %v447, inf
    %453 = vmin.xlane.f32.xlu0 %v452
    %v454 = vpop.xlane.xlu0 %453
    %v455 = vcvt.f32.s32 %v454
    %v456 = vcvt.f32.s32 %v450
    %v457 = vshll.u32 %v456, 16
    %v458 = vadd.s32 %v457, %v455
    %v459 = vsel %vm43, %v433, 2147483647
    %v460 = vand.u32 %v459, 65535
    %v461 = vshra.s32 %v459, 16
    %v462 = vcvt.s32.f32 %v460
    %v463 = vcvt.s32.f32 %v461
    %464 = vmin.xlane.f32.xlu0 %v463
    %v465 = vpop.xlane.xlu0 %464
    %vm466 = vcmp.eq.f32.partialorder %v463, %v465
    %v467 = vsel %vm466, %v462, inf
    %468 = vmin.xlane.f32.xlu0 %v467
    %v469 = vpop.xlane.xlu0 %468
    %v470 = vcvt.f32.s32 %v469
    %v471 = vcvt.f32.s32 %v465
    %v472 = vshll.u32 %v471, 16
    %v473 = vadd.s32 %v472, %v470
    %v474 = vsel %vm43, %v434, 2147483647
    %v475 = vand.u32 %v474, 65535
    %v476 = vshra.s32 %v474, 16
    %v477 = vcvt.s32.f32 %v475
    %v478 = vcvt.s32.f32 %v476
    %479 = vmin.xlane.f32.xlu0 %v478
    %v480 = vpop.xlane.xlu0 %479
    %vm481 = vcmp.eq.f32.partialorder %v478, %v480
    %v482 = vsel %vm481, %v477, inf
    %483 = vmin.xlane.f32.xlu0 %v482
    %v484 = vpop.xlane.xlu0 %483
    %v485 = vcvt.f32.s32 %v484
    %v486 = vcvt.f32.s32 %v480
    %v487 = vshll.u32 %v486, 16
    %v488 = vadd.s32 %v487, %v485
    %v489 = vsel %vm43, %v435, 2147483647
    %v490 = vand.u32 %v489, 65535
    %v491 = vshra.s32 %v489, 16
    %v492 = vcvt.s32.f32 %v490
    %v493 = vcvt.s32.f32 %v491
    %494 = vmin.xlane.f32.xlu0 %v493
    %v495 = vpop.xlane.xlu0 %494
    %vm496 = vcmp.eq.f32.partialorder %v493, %v495
    %v497 = vsel %vm496, %v492, inf
    %498 = vmin.xlane.f32.xlu0 %v497
    %v499 = vpop.xlane.xlu0 %498
    %v500 = vcvt.f32.s32 %v499
    %v501 = vcvt.f32.s32 %v495
    %v502 = vshll.u32 %v501, 16
    %v503 = vadd.s32 %v502, %v500
    %v504 = vsel %vm43, %v436, 2147483647
    %v505 = vand.u32 %v504, 65535
    %v506 = vshra.s32 %v504, 16
    %v507 = vcvt.s32.f32 %v505
    %v508 = vcvt.s32.f32 %v506
    %509 = vmin.xlane.f32.xlu0 %v508
    %v510 = vpop.xlane.xlu0 %509
    %vm511 = vcmp.eq.f32.partialorder %v508, %v510
    %v512 = vsel %vm511, %v507, inf
    %513 = vmin.xlane.f32.xlu0 %v512
    %v514 = vpop.xlane.xlu0 %513
    %v515 = vcvt.f32.s32 %v514
    %v516 = vcvt.f32.s32 %v510
    %v517 = vshll.u32 %v516, 16
    %v518 = vadd.s32 %v517, %v515
    %v519 = vsel %vm43, %v437, 2147483647
    %v520 = vand.u32 %v519, 65535
    %v521 = vshra.s32 %v519, 16
    %v522 = vcvt.s32.f32 %v520
    %v523 = vcvt.s32.f32 %v521
    %524 = vmin.xlane.f32.xlu0 %v523
    %v525 = vpop.xlane.xlu0 %524
    %vm526 = vcmp.eq.f32.partialorder %v523, %v525
    %v527 = vsel %vm526, %v522, inf
    %528 = vmin.xlane.f32.xlu0 %v527
    %v529 = vpop.xlane.xlu0 %528
    %v530 = vcvt.f32.s32 %v529
    %v531 = vcvt.f32.s32 %v525
    %v532 = vshll.u32 %v531, 16
    %v533 = vadd.s32 %v532, %v530
    %v534 = vsel %vm43, %v438, 2147483647
    %v535 = vand.u32 %v534, 65535
    %v536 = vshra.s32 %v534, 16
    %v537 = vcvt.s32.f32 %v535
    %v538 = vcvt.s32.f32 %v536
    %539 = vmin.xlane.f32.xlu0 %v538
    %v540 = vpop.xlane.xlu0 %539
    %vm541 = vcmp.eq.f32.partialorder %v538, %v540
    %v542 = vsel %vm541, %v537, inf
    %543 = vmin.xlane.f32.xlu0 %v542
    %v544 = vpop.xlane.xlu0 %543
    %v545 = vcvt.f32.s32 %v544
    %v546 = vcvt.f32.s32 %v540
    %v547 = vshll.u32 %v546, 16
    %v548 = vadd.s32 %v547, %v545
    %v549 = vsel %vm43, %v439, 2147483647
    %v550 = vand.u32 %v549, 65535
    %v551 = vshra.s32 %v549, 16
    %v552 = vcvt.s32.f32 %v550
    %v553 = vcvt.s32.f32 %v551
    %554 = vmin.xlane.f32.xlu0 %v553
    %v555 = vpop.xlane.xlu0 %554
    %vm556 = vcmp.eq.f32.partialorder %v553, %v555
    %v557 = vsel %vm556, %v552, inf
    %558 = vmin.xlane.f32.xlu0 %v557
    %v559 = vpop.xlane.xlu0 %558
    %v560 = vcvt.f32.s32 %v559
    %v561 = vcvt.f32.s32 %v555
    %v562 = vshll.u32 %v561, 16
    %v563 = vadd.s32 %v562, %v560
    %v564 = vsel %vm43, %v440, 2147483647
    %v565 = vand.u32 %v564, 65535
    %v566 = vshra.s32 %v564, 16
    %v567 = vcvt.s32.f32 %v565
    %v568 = vcvt.s32.f32 %v566
    %569 = vmin.xlane.f32.xlu0 %v568
    %v570 = vpop.xlane.xlu0 %569
    %vm571 = vcmp.eq.f32.partialorder %v568, %v570
    %v572 = vsel %vm571, %v567, inf
    %573 = vmin.xlane.f32.xlu0 %v572
    %v574 = vpop.xlane.xlu0 %573
    %v575 = vcvt.f32.s32 %v574
    %v576 = vcvt.f32.s32 %v570
    %v577 = vshll.u32 %v576, 16
    %v578 = vadd.s32 %v577, %v575
    %v579 = vsel %vm43, %v441, 2147483647
    %v580 = vand.u32 %v579, 65535
    %v581 = vshra.s32 %v579, 16
    %v582 = vcvt.s32.f32 %v580
    %v583 = vcvt.s32.f32 %v581
    %584 = vmin.xlane.f32.xlu0 %v583
    %v585 = vpop.xlane.xlu0 %584
    %vm586 = vcmp.eq.f32.partialorder %v583, %v585
    %v587 = vsel %vm586, %v582, inf
    %588 = vmin.xlane.f32.xlu0 %v587
    %v589 = vpop.xlane.xlu0 %588
    %v590 = vcvt.f32.s32 %v589
    %v591 = vcvt.f32.s32 %v585
    %v592 = vshll.u32 %v591, 16
    %v593 = vadd.s32 %v592, %v590
    %v594 = vsel %vm43, %v442, 2147483647
    %v595 = vand.u32 %v594, 65535
    %v596 = vshra.s32 %v594, 16
    %v597 = vcvt.s32.f32 %v595
    %v598 = vcvt.s32.f32 %v596
    %599 = vmin.xlane.f32.xlu0 %v598
    %v600 = vpop.xlane.xlu0 %599
    %vm601 = vcmp.eq.f32.partialorder %v598, %v600
    %v602 = vsel %vm601, %v597, inf
    %603 = vmin.xlane.f32.xlu0 %v602
    %v604 = vpop.xlane.xlu0 %603
    %v605 = vcvt.f32.s32 %v604
    %v606 = vcvt.f32.s32 %v600
    %v607 = vshll.u32 %v606, 16
    %v608 = vadd.s32 %v607, %v605
    %v609 = vsel %vm43, %v443, 2147483647
    %v610 = vand.u32 %v609, 65535
    %v611 = vshra.s32 %v609, 16
    %v612 = vcvt.s32.f32 %v610
    %v613 = vcvt.s32.f32 %v611
    %614 = vmin.xlane.f32.xlu0 %v613
    %v615 = vpop.xlane.xlu0 %614
    %vm616 = vcmp.eq.f32.partialorder %v613, %v615
    %v617 = vsel %vm616, %v612, inf
    %618 = vmin.xlane.f32.xlu0 %v617
    %v619 = vpop.xlane.xlu0 %618
    %v620 = vcvt.f32.s32 %v619
    %v621 = vcvt.f32.s32 %v615
    %v622 = vshll.u32 %v621, 16
    %v623 = vadd.s32 %v622, %v620
    %v636 = vlaneseq
    %v637 = vshrl.u32 %v636, 7
    %v638 = vsub.s32 %v419, %v637
    %v639 = vrot.slane %v384, %v638
    %v640 = vadd.s32 %v419, 4294967288
    %v641 = vlaneseq
    %v642 = vshrl.u32 %v641, 7
    %v643 = vsub.s32 %v640, %v642
    %v644 = vrot.slane %v387, %v643
    %vm645 = vcmask 130112
    %v646 = vsel %vm645, %v644, %v639
    %v647 = vadd.s32 %v419, 4294967280
    %v648 = vlaneseq
    %v649 = vshrl.u32 %v648, 7
    %v650 = vsub.s32 %v647, %v649
    %v651 = vrot.slane %v390, %v650
    %vm652 = vcmask 195712
    %v653 = vsel %vm652, %v651, %v646
    %v654 = vadd.s32 %v419, 4294967272
    %v655 = vlaneseq
    %v656 = vshrl.u32 %v655, 7
    %v657 = vsub.s32 %v654, %v656
    %v658 = vrot.slane %v393, %v657
    %vm659 = vcmask 261312
    %v660 = vsel %vm659, %v658, %v653
    %v661 = vadd.s32 %v419, 4294967264
    %v662 = vlaneseq
    %v663 = vshrl.u32 %v662, 7
    %v664 = vsub.s32 %v661, %v663
    %v665 = vrot.slane %v396, %v664
    %vm666 = vcmask 326912
    %v667 = vsel %vm666, %v665, %v660
    %v668 = vadd.s32 %v419, 4294967256
    %v669 = vlaneseq
    %v670 = vshrl.u32 %v669, 7
    %v671 = vsub.s32 %v668, %v670
    %v672 = vrot.slane %v399, %v671
    %vm673 = vcmask 392512
    %v674 = vsel %vm673, %v672, %v667
    %v675 = vlaneseq
    %v676 = vshrl.u32 %v675, 7
    %v677 = vsub.s32 %v419, %v676
    %v678 = vrot.slane %v402, %v677
    %v679 = vlaneseq
    %v680 = vshrl.u32 %v679, 7
    %v681 = vsub.s32 %v640, %v680
    %v682 = vrot.slane %v405, %v681
    %v683 = vsel %vm645, %v682, %v678
    %v684 = vlaneseq
    %v685 = vshrl.u32 %v684, 7
    %v686 = vsub.s32 %v647, %v685
    %v687 = vrot.slane %v408, %v686
    %v688 = vsel %vm652, %v687, %v683
    %v689 = vlaneseq
    %v690 = vshrl.u32 %v689, 7
    %v691 = vsub.s32 %v654, %v690
    %v692 = vrot.slane %v411, %v691
    %v693 = vsel %vm659, %v692, %v688
    %v694 = vlaneseq
    %v695 = vshrl.u32 %v694, 7
    %v696 = vsub.s32 %v661, %v695
    %v697 = vrot.slane %v414, %v696
    %v698 = vsel %vm666, %v697, %v693
    %v699 = vlaneseq
    %v700 = vshrl.u32 %v699, 7
    %v701 = vsub.s32 %v668, %v700
    %v702 = vrot.slane %v417, %v701
    %v703 = vsel %vm673, %v702, %v698
    %vm704 = vcmask 1041409
    %v705 = vsel %vm704, %v703, %v674
    %vm707 = vcmask 386048
    %708 = vst.msk [vmem:[#allocation2] sm:$0x3] %vm707, %v705
    %v709 = vlaneseq
    %v710 = vshrl.u32 %v709, 7
    %v711 = vsub.s32 %v419, %v710
    %v712 = vrot.slane %v458, %v711
    %v713 = vlaneseq
    %v714 = vshrl.u32 %v713, 7
    %v715 = vsub.s32 %v640, %v714
    %v716 = vrot.slane %v473, %v715
    %v717 = vsel %vm645, %v716, %v712
    %v718 = vlaneseq
    %v719 = vshrl.u32 %v718, 7
    %v720 = vsub.s32 %v647, %v719
    %v721 = vrot.slane %v488, %v720
    %v722 = vsel %vm652, %v721, %v717
    %v723 = vlaneseq
    %v724 = vshrl.u32 %v723, 7
    %v725 = vsub.s32 %v654, %v724
    %v726 = vrot.slane %v503, %v725
    %v727 = vsel %vm659, %v726, %v722
    %v728 = vlaneseq
    %v729 = vshrl.u32 %v728, 7
    %v730 = vsub.s32 %v661, %v729
    %v731 = vrot.slane %v518, %v730
    %v732 = vsel %vm666, %v731, %v727
    %v733 = vlaneseq
    %v734 = vshrl.u32 %v733, 7
    %v735 = vsub.s32 %v668, %v734
    %v736 = vrot.slane %v533, %v735
    %v737 = vsel %vm673, %v736, %v732
    %v738 = vlaneseq
    %v739 = vshrl.u32 %v738, 7
    %v740 = vsub.s32 %v419, %v739
    %v741 = vrot.slane %v548, %v740
    %v742 = vlaneseq
    %v743 = vshrl.u32 %v742, 7
    %v744 = vsub.s32 %v640, %v743
    %v745 = vrot.slane %v563, %v744
    %v746 = vsel %vm645, %v745, %v741
    %v747 = vlaneseq
    %v748 = vshrl.u32 %v747, 7
    %v749 = vsub.s32 %v647, %v748
    %v750 = vrot.slane %v578, %v749
    %v751 = vsel %vm652, %v750, %v746
    %v752 = vlaneseq
    %v753 = vshrl.u32 %v752, 7
    %v754 = vsub.s32 %v654, %v753
    %v755 = vrot.slane %v593, %v754
    %v756 = vsel %vm659, %v755, %v751
    %v757 = vlaneseq
    %v758 = vshrl.u32 %v757, 7
    %v759 = vsub.s32 %v661, %v758
    %v760 = vrot.slane %v608, %v759
    %v761 = vsel %vm666, %v760, %v756
    %v762 = vlaneseq
    %v763 = vshrl.u32 %v762, 7
    %v764 = vsub.s32 %v668, %v763
    %v765 = vrot.slane %v623, %v764
    %v766 = vsel %vm673, %v765, %v761
    %v767 = vsel %vm704, %v766, %v737
    %768 = vst.msk [vmem:[#allocation4] sm:$0x3] %vm707, %v767
    // Predicated region
    $region10: #{tpu_custom_call.1} parent=1 // pred_check
      _
    $region11: #{tpu_custom_call.1} parent=1 // pred_check_branch
      %770 = sbr.rel (0) target = $region13
    $region12: #{tpu_custom_call.1} parent=1 // pred_region
      %s772 = ssub.s32 32, 32
      %773 = vsyncadd [#allocation3], %s772
      %s775 = sshll.u32 [#allocation2], 4
      %s776 = int_to_ptr.vmem [resolvable:$true] %s775
      %778 = dma.vmem_to_hbm [thread:$0]  %s776, 32, %s2, [#allocation3]
    $region13: #{tpu_custom_call.1} parent=1 // pred_fallthru
      _
    // Predicated region
    $region14: #{tpu_custom_call.1} parent=1 // pred_check
      _
    $region15: #{tpu_custom_call.1} parent=1 // pred_check_branch
      %780 = sbr.rel (0) target = $region17
    $region16: #{tpu_custom_call.1} parent=1 // pred_region
      %s782 = ssub.s32 32, 32
      %783 = vsyncadd [#allocation5], %s782
      %s785 = sshll.u32 [#allocation4], 4
      %s786 = int_to_ptr.vmem [resolvable:$true] %s785
      %788 = dma.vmem_to_hbm [thread:$0]  %s786, 32, %s3, [#allocation5]
    $region17: #{tpu_custom_call.1} parent=1 // pred_fallthru
      _
    // Predicated region
    $region18: #{tpu_custom_call.1} parent=1 // pred_check
      _
    $region19: #{tpu_custom_call.1} parent=1 // pred_check_branch
      %790 = sbr.rel (0) target = $region21
    $region20: #{tpu_custom_call.1} parent=1 // pred_region
      %791 = dma.done [#allocation3], 32
    $region21: #{tpu_custom_call.1} parent=1 // pred_fallthru
      _
    // Predicated region
    $region22: #{tpu_custom_call.1} parent=1 // pred_check
      _
    $region23: #{tpu_custom_call.1} parent=1 // pred_check_branch
      %793 = sbr.rel (0) target = $region25
    $region24: #{tpu_custom_call.1} parent=1 // pred_region
      %794 = dma.done [#allocation5], 32
    $region25: #{tpu_custom_call.1} parent=1 // pred_fallthru
      _
    %795 = vsyncpa [#allocation3], 1
    %796 = vsyncpa [#allocation5], 1

</llo_original>
